<compile_context>
chip_gen: v5e
topology: v5e:2x2
jax: 0.10.0
libtpu: 0.0.40
codegen_flags: <defaults>
</compile_context>

<pallas_src>
import jax
import jax.numpy as jnp
from jax.experimental import pallas as pl
from jax.experimental.pallas import tpu as pltpu


def _mlp_kernel(p_ref, x_ref, o_ref):
    # p_ref : SMEM (9,) f32 -> [w1_00, w1_01, w1_10, w1_11, b1_0, b1_1,
    #                           w2_00, w2_01, b2_0]   (PyTorch (out,in) order)
    # x_ref : VMEM (2, TILE_B) f32  (feature-major: batch on the lane axis)
    # o_ref : VMEM (1, TILE_B) f32
    x0 = x_ref[0:1, :]          # (1, TILE_B)
    x1 = x_ref[1:2, :]          # (1, TILE_B)

    w1_00 = p_ref[0]
    w1_01 = p_ref[1]
    w1_10 = p_ref[2]
    w1_11 = p_ref[3]
    b1_0 = p_ref[4]
    b1_1 = p_ref[5]
    w2_00 = p_ref[6]
    w2_01 = p_ref[7]
    b2_0 = p_ref[8]

    # fc1 + ReLU (PyTorch: h_j = sum_i x_i * W1[j, i] + b1[j])
    h0 = jnp.maximum(x0 * w1_00 + x1 * w1_01 + b1_0, 0.0)
    h1 = jnp.maximum(x0 * w1_10 + x1 * w1_11 + b1_1, 0.0)
    # fc2
    o_ref[...] = h0 * w2_00 + h1 * w2_01 + b2_0


def _round_up(n, m):
    return pl.cdiv(n, m) * m


def network_forward(x, w1, b1, w2, b2, *, tile_b=8192):
    """Forward pass of Network: fc2(relu(fc1(x))).

    x: (B, 2) f32; w1: (2, 2) [PyTorch (out,in)]; b1: (2,); w2: (1, 2); b2: (1,).
    Returns (B, 1) f32.
    """
    B = x.shape[0]
    x = x.astype(jnp.float32)

    # Flatten the 9 parameters into a single SMEM-resident vector.
    params = jnp.concatenate(
        [w1.reshape(-1), b1.reshape(-1), w2.reshape(-1), b2.reshape(-1)]
    ).astype(jnp.float32)                                   # (9,)

    # Feature-major layout; pad the batch to a multiple of the lane tile.
    tile_b = min(tile_b, _round_up(B, 128))                 # multiple of 128
    Bp = _round_up(B, tile_b)
    x_t = jnp.pad(x, ((0, Bp - B), (0, 0))).T               # (2, Bp)

    n_tiles = Bp // tile_b

    out = pl.pallas_call(
        _mlp_kernel,
        out_shape=jax.ShapeDtypeStruct((1, Bp), jnp.float32),
        grid=(n_tiles,),
        in_specs=[
            # 9 scalar parameters, whole array resident in SMEM.
            pl.BlockSpec(memory_space=pltpu.MemorySpace.SMEM),
            # x tiles: batch on the lane axis, pipelined over the grid.
            pl.BlockSpec((2, tile_b), lambda i: (0, i)),
        ],
        out_specs=pl.BlockSpec((1, tile_b), lambda i: (0, i)),
        compiler_params=pltpu.CompilerParams(
            dimension_semantics=("parallel",)),
    )(params, x_t)

    return out[0, :B].reshape(B, 1)


def _reference(x, w1, b1, w2, b2):
    h = jnp.maximum(x @ w1.T + b1, 0.0)
    return h @ w2.T + b2


if __name__ == "__main__":
    key = jax.random.PRNGKey(0)
    kx, k1, k2, k3, k4 = jax.random.split(key, 5)

    B = 8
    x = jax.random.normal(kx, (B, 2), dtype=jnp.float32)

    # Deterministic parameters (shapes per nn.Linear(2,2,bias) / nn.Linear(2,1,bias)).
    w1 = jax.random.normal(k1, (2, 2), dtype=jnp.float32) * 0.5   # fc1.weight (out,in)
    b1 = jax.random.normal(k2, (2,), dtype=jnp.float32) * 0.1     # fc1.bias
    w2 = jax.random.normal(k3, (1, 2), dtype=jnp.float32) * 0.5   # fc2.weight (out,in)
    b2 = jax.random.normal(k4, (1,), dtype=jnp.float32) * 0.1     # fc2.bias

    y = network_forward(x, w1, b1, w2, b2)
    jax.block_until_ready(y)

    y_ref = _reference(x, w1, b1, w2, b2)
    assert y.shape == (B, 1)
    assert jnp.allclose(y, y_ref, atol=1e-5, rtol=1e-5), "mismatch vs reference"

    print("KERNEL_OK")
</pallas_src>

<mosaic_0001>
module attributes {stable_mosaic.version = 11 : i64} {
  func.func @_mlp_kernel(%arg0: i32, %arg1: memref<9xf32, #tpu.memory_space<smem>>, %arg2: memref<2x128xf32, #tpu.memory_space<vmem>>, %arg3: memref<1x128xf32, #tpu.memory_space<vmem>>) attributes {dimension_semantics = [#tpu.dimension_semantics<parallel>], iteration_bounds = array<i64: 1>, scalar_prefetch = 0 : i64, scratch_operands = 0 : i64, tpu.core_type = #tpu.core_type<tc>, window_params = [{transform_indices = @transform_0, window_bounds = array<i64: 9>}, {transform_indices = @transform_1, window_bounds = array<i64: 2, 128>}, {transform_indices = @transform_2, window_bounds = array<i64: 1, 128>}]} {
    %c0 = arith.constant 0 : index
    %c0_0 = arith.constant 0 : index
    %0 = vector.load %arg2[%c0, %c0_0] : memref<2x128xf32, #tpu.memory_space<vmem>>, vector<1x128xf32>
    %c1 = arith.constant 1 : index
    %c0_1 = arith.constant 0 : index
    %1 = vector.load %arg2[%c1, %c0_1] : memref<2x128xf32, #tpu.memory_space<vmem>>, vector<1x128xf32>
    %c0_2 = arith.constant 0 : index
    %2 = memref.load %arg1[%c0_2] : memref<9xf32, #tpu.memory_space<smem>>
    %c1_3 = arith.constant 1 : index
    %3 = memref.load %arg1[%c1_3] : memref<9xf32, #tpu.memory_space<smem>>
    %c2 = arith.constant 2 : index
    %4 = memref.load %arg1[%c2] : memref<9xf32, #tpu.memory_space<smem>>
    %c3 = arith.constant 3 : index
    %5 = memref.load %arg1[%c3] : memref<9xf32, #tpu.memory_space<smem>>
    %c4 = arith.constant 4 : index
    %6 = memref.load %arg1[%c4] : memref<9xf32, #tpu.memory_space<smem>>
    %c5 = arith.constant 5 : index
    %7 = memref.load %arg1[%c5] : memref<9xf32, #tpu.memory_space<smem>>
    %c6 = arith.constant 6 : index
    %8 = memref.load %arg1[%c6] : memref<9xf32, #tpu.memory_space<smem>>
    %c7 = arith.constant 7 : index
    %9 = memref.load %arg1[%c7] : memref<9xf32, #tpu.memory_space<smem>>
    %c8 = arith.constant 8 : index
    %10 = memref.load %arg1[%c8] : memref<9xf32, #tpu.memory_space<smem>>
    %11 = vector.broadcast %2 : f32 to vector<1x128xf32>
    %12 = arith.mulf %0, %11 : vector<1x128xf32>
    %13 = vector.broadcast %3 : f32 to vector<1x128xf32>
    %14 = arith.mulf %1, %13 : vector<1x128xf32>
    %15 = arith.addf %12, %14 : vector<1x128xf32>
    %16 = vector.broadcast %6 : f32 to vector<1x128xf32>
    %17 = arith.addf %15, %16 : vector<1x128xf32>
    %cst = arith.constant 0.000000e+00 : f32
    %18 = vector.broadcast %cst : f32 to vector<1x128xf32>
    %19 = arith.maximumf %17, %18 : vector<1x128xf32>
    %20 = vector.broadcast %4 : f32 to vector<1x128xf32>
    %21 = arith.mulf %0, %20 : vector<1x128xf32>
    %22 = vector.broadcast %5 : f32 to vector<1x128xf32>
    %23 = arith.mulf %1, %22 : vector<1x128xf32>
    %24 = arith.addf %21, %23 : vector<1x128xf32>
    %25 = vector.broadcast %7 : f32 to vector<1x128xf32>
    %26 = arith.addf %24, %25 : vector<1x128xf32>
    %cst_4 = arith.constant 0.000000e+00 : f32
    %27 = vector.broadcast %cst_4 : f32 to vector<1x128xf32>
    %28 = arith.maximumf %26, %27 : vector<1x128xf32>
    %29 = vector.broadcast %8 : f32 to vector<1x128xf32>
    %30 = arith.mulf %19, %29 : vector<1x128xf32>
    %31 = vector.broadcast %9 : f32 to vector<1x128xf32>
    %32 = arith.mulf %28, %31 : vector<1x128xf32>
    %33 = arith.addf %30, %32 : vector<1x128xf32>
    %34 = vector.broadcast %10 : f32 to vector<1x128xf32>
    %35 = arith.addf %33, %34 : vector<1x128xf32>
    %c0_5 = arith.constant 0 : index
    %c0_6 = arith.constant 0 : index
    %36 = vector.load %arg3[%c0_5, %c0_6] : memref<1x128xf32, #tpu.memory_space<vmem>>, vector<1x128xf32>
    tpu.vector_store %arg3[%c0_5, %c0_6], %35 {strides = array<i32>} : memref<1x128xf32, #tpu.memory_space<vmem>>, vector<1x128xf32>,
    return
  }
  func.func @transform_0(%arg0: i32) -> i32 {
    %c0_i32 = arith.constant 0 : i32
    %c0_i32_0 = arith.constant 0 : i32
    return %c0_i32 : i32
  }
  func.func @transform_1(%arg0: i32) -> (i32, i32) {
    %c0_i32 = arith.constant 0 : i32
    %c0_i32_0 = arith.constant 0 : i32
    return %c0_i32, %arg0 : i32, i32
  }
  func.func @transform_2(%arg0: i32) -> (i32, i32) {
    %c0_i32 = arith.constant 0 : i32
    %c0_i32_0 = arith.constant 0 : i32
    return %c0_i32, %arg0 : i32, i32
  }
}

</mosaic_0001>

<llo_original>
// kernel: tpu_custom_call.1
$region0: #{tpu_custom_call.1}
  #allocation0 [shape = 'u32[]', space=smem, size = 0x4, offset = 0x4, fixed_abs, tag = 'smem constant byte address 0x4 - core index']
  #allocation1 [shape = 'u32[72,128]{1,0:T(1,128)}', space=vmem, size = 0x9000, scoped, tag = 'internal scratch']
  %s0 = inlined_call_operand.hbm [shape: f32[9], index: 0, kind: input, shape index: {}]
  %s1 = inlined_call_operand.hbm [shape: f32[2,128], index: 1, kind: input, shape index: {}]
  %s2 = inlined_call_operand.hbm [shape: f32[1,128], index: 2, kind: output, shape index: {}]
  %s3 = sld [smem:[#allocation0]]
  $region26: #{tpu_custom_call.1} parent=0
    _
  %s5 = ssub.s32 1, %s3
  %s6 = scalar_select 0, %s5, %s3
  $region1: #{tpu_custom_call.1} parent=0
    #allocation2 [shape = 'u8[512]{0}', space=smem, size = 0x200, scoped, tag = 'input window, operand 0, single buffered']
    #allocation3 [shape = 's32[1]{0}', space=sflag, size = 0x4, scoped, tag = 'scoped memory for tpu_custom_call.1']
    #allocation4 [shape = 's32[1]{0}', space=sflag, size = 0x4, scoped, tag = 'scoped memory for tpu_custom_call.1']
    #allocation5 [shape = 's32[1]{0}', space=sflag, size = 0x4, scoped, tag = 'scoped memory for tpu_custom_call.1']
    #allocation6 [shape = 'u8[1024]{0}', space=vmem, size = 0x400, scoped, tag = 'input window, operand 1, single buffered']
    #allocation7 [shape = 'u8[512]{0}', space=vmem, size = 0x400, scoped, tag = 'output window, operand 0, single buffered']
    %7 = vsyncpa [#allocation5], 0
    %8 = vsyncpa [#allocation3], 0
    %9 = vsyncpa [#allocation4], 0
    // Predicated region
    $region2: #{tpu_custom_call.1} parent=1 // pred_check
      _
    $region3: #{tpu_custom_call.1} parent=1 // pred_check_branch
      %11 = sbr.rel (0) target = $region5
    $region4: #{tpu_custom_call.1} parent=1 // pred_region
      %13 = vsyncadd [#allocation5], 0
      %s15 = sshll.u32 %s0, 4
      %s16 = int_to_ptr.hbm [resolvable:$true] %s15
      %18 = dma.hbm_to_smem %s16, 16, [#allocation2], [#allocation5]
    $region5: #{tpu_custom_call.1} parent=1 // pred_fallthru
      _
    // Predicated region
    $region6: #{tpu_custom_call.1} parent=1 // pred_check
      _
    $region7: #{tpu_custom_call.1} parent=1 // pred_check_branch
      %20 = sbr.rel (0) target = $region9
    $region8: #{tpu_custom_call.1} parent=1 // pred_region
      %22 = vsyncadd [#allocation3], 0
      %s24 = sshll.u32 %s1, 4
      %s25 = int_to_ptr.hbm [resolvable:$true] %s24
      %s26 = sshll.u32 [#allocation6], 4
      %s27 = int_to_ptr.vmem [resolvable:$true] %s26
      %29 = dma.hbm_to_vmem [thread:$0]  %s25, 32, %s27, [#allocation3]
    $region9: #{tpu_custom_call.1} parent=1 // pred_fallthru
      _
    // Predicated region
    $region10: #{tpu_custom_call.1} parent=1 // pred_check
      _
    $region11: #{tpu_custom_call.1} parent=1 // pred_check_branch
      %31 = sbr.rel (0) target = $region13
    $region12: #{tpu_custom_call.1} parent=1 // pred_region
      %33 = dma.done [#allocation5], 16
    $region13: #{tpu_custom_call.1} parent=1 // pred_fallthru
      _
    // Predicated region
    $region14: #{tpu_custom_call.1} parent=1 // pred_check
      _
    $region15: #{tpu_custom_call.1} parent=1 // pred_check_branch
      %35 = sbr.rel (0) target = $region17
    $region16: #{tpu_custom_call.1} parent=1 // pred_region
      %37 = dma.done [#allocation3], 32
    $region17: #{tpu_custom_call.1} parent=1 // pred_fallthru
      _
    %38 = sfence
    %v39 = vld [vmem:[#allocation6] sm:$0x1]
    %v40 = vld [vmem:[#allocation6 + $0x1] sm:$0x1]
    %s41 = sld [smem:[#allocation2]]
    %s42 = sld [smem:[#allocation2 + $0x1]]
    %s43 = sld [smem:[#allocation2 + $0x2]]
    %s44 = sld [smem:[#allocation2 + $0x3]]
    %s45 = sld [smem:[#allocation2 + $0x4]]
    %s46 = sld [smem:[#allocation2 + $0x5]]
    %s47 = sld [smem:[#allocation2 + $0x6]]
    %s48 = sld [smem:[#allocation2 + $0x7]]
    %s49 = sld [smem:[#allocation2 + $0x8]]
    %v50 = vstv %s41
    %v51 = vmul.f32 %v39, %v50
    %v52 = vstv %s42
    %v53 = vmul.f32 %v40, %v52
    %v54 = vadd.f32 %v51, %v53
    %v55 = vstv %s45
    %v56 = vadd.f32 %v54, %v55
    %v57 = vmax.f32 %v56, 0.0
    %v58 = vstv %s43
    %v59 = vmul.f32 %v39, %v58
    %v60 = vstv %s44
    %v61 = vmul.f32 %v40, %v60
    %v62 = vadd.f32 %v59, %v61
    %v63 = vstv %s46
    %v64 = vadd.f32 %v62, %v63
    %v65 = vmax.f32 %v64, 0.0
    %v66 = vstv %s47
    %v67 = vmul.f32 %v57, %v66
    %v68 = vstv %s48
    %v69 = vmul.f32 %v65, %v68
    %v70 = vadd.f32 %v67, %v69
    %v71 = vstv %s49
    %v72 = vadd.f32 %v70, %v71
    %73 = vst [vmem:[#allocation7] sm:$0x1] %v72
    // Predicated region
    $region18: #{tpu_custom_call.1} parent=1 // pred_check
      _
    $region19: #{tpu_custom_call.1} parent=1 // pred_check_branch
      %75 = sbr.rel (0) target = $region21
    $region20: #{tpu_custom_call.1} parent=1 // pred_region
      %77 = vsyncadd [#allocation4], 0
      %s79 = sshll.u32 [#allocation7], 4
      %s80 = int_to_ptr.vmem [resolvable:$true] %s79
      %s81 = sshll.u32 %s2, 4
      %s82 = int_to_ptr.hbm [resolvable:$true] %s81
      %84 = dma.vmem_to_hbm [thread:$0]  %s80, 16, %s82, [#allocation4]
    $region21: #{tpu_custom_call.1} parent=1 // pred_fallthru
      _
    // Predicated region
    $region22: #{tpu_custom_call.1} parent=1 // pred_check
      _
    $region23: #{tpu_custom_call.1} parent=1 // pred_check_branch
      %86 = sbr.rel (0) target = $region25
    $region24: #{tpu_custom_call.1} parent=1 // pred_region
      %88 = dma.done [#allocation4], 16
    $region25: #{tpu_custom_call.1} parent=1 // pred_fallthru
      _
    %89 = vsyncpa [#allocation3], 1
    %90 = vsyncpa [#allocation4], 1
    %91 = vsyncpa [#allocation5], 1

</llo_original>
